<compile_context>
chip_gen: v7x
topology: tpu7x:2x2x1
jax: 0.10.0
libtpu: 0.0.40
codegen_flags: <defaults>
</compile_context>

<pallas_src>
import jax
import jax.numpy as jnp
from jax.experimental import pallas as pl
from jax.experimental.pallas import tpu as pltpu  # noqa: F401 (TPU backend assumed)

BN_EPS = 1e-5
LEAKY_SLOPE = 0.2   # conv-stack LeakyReLU(0.2)
K = 3               # every conv / conv-transpose kernel is size 3
L0 = 34             # length after pre_net view (B, 4, 34)
L1 = 36             # length after ConvTranspose1d #1
S = 38              # length after ConvTranspose1d #2 == universal segment stride
L_OUT = 34          # final output length


# --------------------------------------------------------------------------
# Fused kernel: pre_net (Linear->BN->identity->Linear) + view(B,4,34) +
#               ConvT(4,32,3)+BN+LReLU -> ConvT(32,32,3)+BN+LReLU ->
#               Conv(32,32,3) -> Conv(32,dim,3)
#
# Conv activations are channel-major and lane-dense: (C, B*S), column b*S+t.
# Each batch segment carries its valid data in t < len and zeros in the pad
# columns, so every conv tap is a single GLOBAL lane shift of the whole slab
# and each conv layer is ONE matmul (Cout, K*Cin) @ (K*Cin, B*S).
# --------------------------------------------------------------------------
def _pose_decoder_kernel(feat_ref, w1_ref, w2_ref, bpre_ref, wA_ref, wc4_ref,
                         pch_ref, out_ref):
    f32 = jnp.float32
    B = feat_ref.shape[0]
    dim = out_ref.shape[0]
    N = B * S

    def lrelu(v):
        return jnp.where(v >= 0, v, LEAKY_SLOPE * v)

    def shr(x, s):   # shift lanes right by s (zeros enter on the left)
        if s == 0:
            return x
        return jnp.concatenate(
            [jnp.zeros((x.shape[0], s), f32), x[:, :N - s]], axis=1)

    def shl(x, s):   # shift lanes left by s (zeros enter on the right)
        if s == 0:
            return x
        return jnp.concatenate(
            [x[:, s:], jnp.zeros((x.shape[0], s), f32)], axis=1)

    # ---------------- pre_net (BN folded into W1/bias; LReLU(True)==identity) -
    h = jnp.dot(feat_ref[...], w1_ref[...], preferred_element_type=f32)
    h = h + bpre_ref[:, 0:64]                                        # (B, 64)
    p = jnp.dot(h, w2_ref[...], preferred_element_type=f32)          # one matmul
    p = p + bpre_ref[:, 64:64 + 4 * L0]                              # (B, 136)

    # ---- view(B,4,34) -> channel-major lane-dense rows (1, B*S) per channel --
    # Segment layout: column b*S + t ; t in [0,34) data, [34,38) zero pad.
    zpad = jnp.zeros((1, S - L0), f32)
    rows = []
    for c in range(4):
        pieces = []
        for b in range(B):
            pieces.append(p[b:b + 1, c * L0:(c + 1) * L0])
            pieces.append(zpad)
        rows.append(jnp.concatenate(pieces, axis=1))                 # (1, N)

    # ---------------- ConvTranspose1d(4 -> 32, 3) + BN + LReLU ----------------
    # operand row k*4+c = rows[c] shifted right by k (segment pads >= 2 zeros,
    # so the global shift equals the per-segment shift).
    op1 = jnp.concatenate(
        [shr(rows[c], k) for k in range(K) for c in range(4)], axis=0)  # (12, N)
    h1 = jnp.dot(wA_ref[:, 0:12], op1, preferred_element_type=f32)
    s1 = pch_ref[0:32, 0:1]
    sh1 = pch_ref[0:32, 1:2]
    # zero per-segment pad columns t in [36,38) so the next ConvT sees zeros
    # beyond its true input length.
    m36 = jnp.concatenate(
        [jnp.ones((1, L1), f32), jnp.zeros((1, S - L1), f32)] * B, axis=1)
    h1 = lrelu(h1 * s1 + sh1) * m36                                  # (32,N) t<36

    # ---------------- ConvTranspose1d(32 -> 32, 3) + BN + LReLU ----------------
    op2 = jnp.concatenate([h1, shr(h1, 1), shr(h1, 2)], axis=0)      # (96, N)
    h2 = jnp.dot(wA_ref[:, 12:108], op2, preferred_element_type=f32)
    s2 = pch_ref[0:32, 2:3]
    sh2 = pch_ref[0:32, 3:4]
    h2 = lrelu(h2 * s2 + sh2)                                        # (32,N) all 38 valid

    # ---------------- Conv1d(32 -> 32, 3) --------------------------------------
    op3 = jnp.concatenate([h2, shl(h2, 1), shl(h2, 2)], axis=0)      # (96, N)
    h3 = jnp.dot(wA_ref[:, 108:204], op3, preferred_element_type=f32)
    h3 = h3 + pch_ref[0:32, 4:5]                                     # valid t<36

    # ---------------- Conv1d(32 -> dim, 3) -------------------------------------
    op4 = jnp.concatenate([h3, shl(h3, 1), shl(h3, 2)], axis=0)      # (96, N)
    h4 = jnp.dot(wc4_ref[...], op4, preferred_element_type=f32)
    h4 = h4 + pch_ref[0:dim, 5:6]                                    # valid t<34

    # ---------------- single lane-dense output store ---------------------------
    out_ref[...] = h4.astype(out_ref.dtype)                          # (dim, B*S)


# --------------------------------------------------------------------------
# One-time parameter preparation (hoisted out of the forward hot path):
# BN folding, tap-major/im2col weight layouts, tight packing of operands.
# --------------------------------------------------------------------------
def prepare_pose_decoder_params(p, dim):
    f32 = jnp.float32

    # pre_net: fold Linear bias + BatchNorm1d (inference) into W1 / bias.
    s_pre = p['bn_pre_gamma'] / jnp.sqrt(p['bn_pre_var'] + BN_EPS)
    w1f = (p['fc1_w'] * s_pre[None, :]).astype(f32)                       # (32, 64)
    b1f = (p['fc1_b'] - p['bn_pre_mean']) * s_pre + p['bn_pre_beta']      # (64,)
    bpre = jnp.concatenate([b1f, p['fc2_b']]).reshape(1, 64 + 4 * L0).astype(f32)

    # Conv weights in im2col layout (Cout, K*Cin), tap-major (tap k block).
    def convt_w(w):   # torch ConvTranspose1d weight (Cin, Cout, K)
        return jnp.concatenate([w[:, :, k].T for k in range(K)], axis=1)

    def conv_w(w):    # torch Conv1d weight (Cout, Cin, K)
        return jnp.concatenate([w[:, :, k] for k in range(K)], axis=1)

    wA = jnp.concatenate([convt_w(p['ct1_w']),            # (32, 12)
                          convt_w(p['ct2_w']),            # (32, 96)
                          conv_w(p['c3_w'])],             # (32, 96)
                         axis=1).astype(f32)              # (32, 204) packed tight
    wc4 = conv_w(p['c4_w']).astype(f32)                   # (dim, 96)

    # Per-channel BatchNorm/bias params packed into one (R, 8) operand.
    def bn_fold(bias, g, be, m, v):
        sc = g / jnp.sqrt(v + BN_EPS)
        return sc, (bias - m) * sc + be

    s1, sh1 = bn_fold(p['ct1_b'], p['bn1_gamma'], p['bn1_beta'],
                      p['bn1_mean'], p['bn1_var'])
    s2, sh2 = bn_fold(p['ct2_b'], p['bn2_gamma'], p['bn2_beta'],
                      p['bn2_mean'], p['bn2_var'])
    R = max(32, dim)

    def col(v):
        v = jnp.asarray(v, f32)
        return jnp.pad(v, (0, R - v.shape[0]))

    pch = jnp.stack([col(s1), col(sh1), col(s2), col(sh2),
                     col(p['c3_b']), col(p['c4_b']),
                     jnp.zeros((R,), f32), jnp.zeros((R,), f32)], axis=1)  # (R, 8)

    return dict(w1=w1f, w2=p['fc2_w'].astype(f32), bpre=bpre,
                wA=wA, wc4=wc4, pch=pch)


# --------------------------------------------------------------------------
# Forward wrapper: one pallas_call, then one fused XLA slice+transpose.
# --------------------------------------------------------------------------
def pose_decoder_conv_forward(feat, prep):
    B = feat.shape[0]
    dim = prep['wc4'].shape[0]
    out = pl.pallas_call(
        _pose_decoder_kernel,
        out_shape=jax.ShapeDtypeStruct((dim, B * S), jnp.float32),
    )(feat.astype(jnp.float32), prep['w1'], prep['w2'], prep['bpre'],
      prep['wA'], prep['wc4'], prep['pch'])
    # (dim, B*S) -> drop per-segment pad columns -> (B, 34, dim)
    return out.reshape(dim, B, S)[:, :, :L_OUT].transpose(1, 2, 0)


# --------------------------------------------------------------------------
# Pure-JAX reference of the PyTorch forward (for verification)
# --------------------------------------------------------------------------
def reference_forward(feat, p, dim):
    HI = jax.lax.Precision.HIGHEST

    h = jnp.dot(feat, p['fc1_w'], precision=HI) + p['fc1_b']
    h = ((h - p['bn_pre_mean']) / jnp.sqrt(p['bn_pre_var'] + BN_EPS)
         * p['bn_pre_gamma'] + p['bn_pre_beta'])
    # LeakyReLU(negative_slope=1.0) == identity
    h = jnp.dot(h, p['fc2_w'], precision=HI) + p['fc2_b']
    x = h.reshape(feat.shape[0], 4, -1)

    def conv_t(x, w, b):                        # w: (Ci, Co, K)
        B, Ci, L = x.shape
        Kk = w.shape[2]
        out = jnp.zeros((B, w.shape[1], L + Kk - 1), jnp.float32)
        for k in range(Kk):
            out = out.at[:, :, k:k + L].add(
                jnp.einsum('io,bil->bol', w[:, :, k], x, precision=HI))
        return out + b[None, :, None]

    def conv(x, w, b):                          # w: (Co, Ci, K)
        B, Ci, L = x.shape
        Kk = w.shape[2]
        Lo = L - Kk + 1
        out = jnp.zeros((B, w.shape[0], Lo), jnp.float32)
        for k in range(Kk):
            out = out + jnp.einsum('oi,bil->bol', w[:, :, k], x[:, :, k:k + Lo],
                                   precision=HI)
        return out + b[None, :, None]

    def bn(x, g, be, m, v):
        return ((x - m[None, :, None]) / jnp.sqrt(v[None, :, None] + BN_EPS)
                * g[None, :, None] + be[None, :, None])

    def lrelu(x):
        return jnp.where(x >= 0, x, LEAKY_SLOPE * x)

    y = lrelu(bn(conv_t(x, p['ct1_w'], p['ct1_b']),
                 p['bn1_gamma'], p['bn1_beta'], p['bn1_mean'], p['bn1_var']))
    y = lrelu(bn(conv_t(y, p['ct2_w'], p['ct2_b']),
                 p['bn2_gamma'], p['bn2_beta'], p['bn2_mean'], p['bn2_var']))
    y = conv(y, p['c3_w'], p['c3_b'])
    y = conv(y, p['c4_w'], p['c4_b'])
    return jnp.transpose(y, (0, 2, 1))


if __name__ == "__main__":
    B, dim, length = 2, 16, 34
    key = jax.random.PRNGKey(0)
    keys = iter(jax.random.split(key, 40))

    def w(shape, scale=0.1):
        return scale * jax.random.normal(next(keys), shape, dtype=jnp.float32)

    params = dict(
        fc1_w=w((32, 64)), fc1_b=w((64,)),
        bn_pre_gamma=1.0 + w((64,)), bn_pre_beta=w((64,)),
        bn_pre_mean=w((64,)), bn_pre_var=1.0 + jnp.abs(w((64,))),
        fc2_w=w((64, 136)), fc2_b=w((136,)),
        ct1_w=w((4, 32, 3)), ct1_b=w((32,)),
        bn1_gamma=1.0 + w((32,)), bn1_beta=w((32,)),
        bn1_mean=w((32,)), bn1_var=1.0 + jnp.abs(w((32,))),
        ct2_w=w((32, 32, 3)), ct2_b=w((32,)),
        bn2_gamma=1.0 + w((32,)), bn2_beta=w((32,)),
        bn2_mean=w((32,)), bn2_var=1.0 + jnp.abs(w((32,))),
        c3_w=w((32, 32, 3)), c3_b=w((32,)),
        c4_w=w((dim, 32, 3)), c4_b=w((dim,)),
    )

    feat = jax.random.normal(next(keys), (B, 32), dtype=jnp.float32)

    # One-time parameter preparation (hoisted out of the forward hot path).
    prep = prepare_pose_decoder_params(params, dim)

    fwd = jax.jit(pose_decoder_conv_forward)
    out = jax.block_until_ready(fwd(feat, prep))

    ref = reference_forward(feat, params, dim)
    assert out.shape == (B, length, dim), out.shape
    err = float(jnp.max(jnp.abs(out - ref)))
    assert jnp.allclose(out, ref, atol=2e-3, rtol=2e-3), f"max abs err = {err}"

    print("KERNEL_OK")
</pallas_src>

<mosaic_0001>
module attributes {stable_mosaic.version = 11 : i64} {
  func.func @_pose_decoder_kernel(%arg0: memref<2x32xf32, #tpu.memory_space<vmem>>, %arg1: memref<32x64xf32, #tpu.memory_space<vmem>>, %arg2: memref<64x136xf32, #tpu.memory_space<vmem>>, %arg3: memref<1x200xf32, #tpu.memory_space<vmem>>, %arg4: memref<32x204xf32, #tpu.memory_space<vmem>>, %arg5: memref<16x96xf32, #tpu.memory_space<vmem>>, %arg6: memref<32x8xf32, #tpu.memory_space<vmem>>, %arg7: memref<16x76xf32, #tpu.memory_space<vmem>>) attributes {dimension_semantics = [], scalar_prefetch = 0 : i64, scratch_operands = 0 : i64, tpu.core_type = #tpu.core_type<tc>} {
    %c0 = arith.constant 0 : index
    %c0_0 = arith.constant 0 : index
    %0 = vector.load %arg0[%c0, %c0_0] : memref<2x32xf32, #tpu.memory_space<vmem>>, vector<2x32xf32>
    %c0_1 = arith.constant 0 : index
    %c0_2 = arith.constant 0 : index
    %1 = vector.load %arg1[%c0_1, %c0_2] : memref<32x64xf32, #tpu.memory_space<vmem>>, vector<32x64xf32>
    %cst = arith.constant dense<0.000000e+00> : vector<2x64xf32>
    %2 = tpu.matmul %0, %1, %cst {dimension_numbers = #tpu.dot_dimension_numbers<[1], [0], [0], [1], [0, 0, 1, 1], [], []>} : vector<2x32xf32>, vector<32x64xf32>, vector<2x64xf32> -> vector<2x64xf32>
    %c0_3 = arith.constant 0 : index
    %c0_4 = arith.constant 0 : index
    %3 = vector.load %arg3[%c0_3, %c0_4] : memref<1x200xf32, #tpu.memory_space<vmem>>, vector<1x64xf32>
    %4 = vector.broadcast %3 : vector<1x64xf32> to vector<2x64xf32>
    %5 = arith.addf %2, %4 : vector<2x64xf32>
    %c0_5 = arith.constant 0 : index
    %c0_6 = arith.constant 0 : index
    %6 = vector.load %arg2[%c0_5, %c0_6] : memref<64x136xf32, #tpu.memory_space<vmem>>, vector<64x136xf32>
    %cst_7 = arith.constant dense<0.000000e+00> : vector<2x136xf32>
    %7 = tpu.matmul %5, %6, %cst_7 {dimension_numbers = #tpu.dot_dimension_numbers<[1], [0], [0], [1], [0, 0, 1, 1], [], []>} : vector<2x64xf32>, vector<64x136xf32>, vector<2x136xf32> -> vector<2x136xf32>
    %c0_8 = arith.constant 0 : index
    %c64 = arith.constant 64 : index
    %8 = vector.load %arg3[%c0_8, %c64] : memref<1x200xf32, #tpu.memory_space<vmem>>, vector<1x136xf32>
    %9 = vector.broadcast %8 : vector<1x136xf32> to vector<2x136xf32>
    %10 = arith.addf %7, %9 : vector<2x136xf32>
    %cst_9 = arith.constant 0.000000e+00 : f32
    %11 = vector.broadcast %cst_9 : f32 to vector<1x4xf32>
    %12 = vector.extract_strided_slice %10 {offsets = [0, 0], sizes = [1, 34], strides = [1, 1]} : vector<2x136xf32> to vector<1x34xf32>
    %13 = vector.extract_strided_slice %10 {offsets = [1, 0], sizes = [1, 34], strides = [1, 1]} : vector<2x136xf32> to vector<1x34xf32>
    %14 = tpu.concatenate %12, %11, %13, %11 in 1 : vector<1x34xf32>, vector<1x4xf32>, vector<1x34xf32>, vector<1x4xf32> -> vector<1x76xf32>
    %15 = vector.extract_strided_slice %10 {offsets = [0, 34], sizes = [1, 34], strides = [1, 1]} : vector<2x136xf32> to vector<1x34xf32>
    %16 = vector.extract_strided_slice %10 {offsets = [1, 34], sizes = [1, 34], strides = [1, 1]} : vector<2x136xf32> to vector<1x34xf32>
    %17 = tpu.concatenate %15, %11, %16, %11 in 1 : vector<1x34xf32>, vector<1x4xf32>, vector<1x34xf32>, vector<1x4xf32> -> vector<1x76xf32>
    %18 = vector.extract_strided_slice %10 {offsets = [0, 68], sizes = [1, 34], strides = [1, 1]} : vector<2x136xf32> to vector<1x34xf32>
    %19 = vector.extract_strided_slice %10 {offsets = [1, 68], sizes = [1, 34], strides = [1, 1]} : vector<2x136xf32> to vector<1x34xf32>
    %20 = tpu.concatenate %18, %11, %19, %11 in 1 : vector<1x34xf32>, vector<1x4xf32>, vector<1x34xf32>, vector<1x4xf32> -> vector<1x76xf32>
    %21 = vector.extract_strided_slice %10 {offsets = [0, 102], sizes = [1, 34], strides = [1, 1]} : vector<2x136xf32> to vector<1x34xf32>
    %22 = vector.extract_strided_slice %10 {offsets = [1, 102], sizes = [1, 34], strides = [1, 1]} : vector<2x136xf32> to vector<1x34xf32>
    %23 = tpu.concatenate %21, %11, %22, %11 in 1 : vector<1x34xf32>, vector<1x4xf32>, vector<1x34xf32>, vector<1x4xf32> -> vector<1x76xf32>
    %cst_10 = arith.constant 0.000000e+00 : f32
    %24 = vector.broadcast %cst_10 : f32 to vector<1x1xf32>
    %25 = vector.extract_strided_slice %14 {offsets = [0, 0], sizes = [1, 75], strides = [1, 1]} : vector<1x76xf32> to vector<1x75xf32>
    %26 = tpu.concatenate %24, %25 in 1 : vector<1x1xf32>, vector<1x75xf32> -> vector<1x76xf32>
    %cst_11 = arith.constant 0.000000e+00 : f32
    %27 = vector.broadcast %cst_11 : f32 to vector<1x1xf32>
    %28 = vector.extract_strided_slice %17 {offsets = [0, 0], sizes = [1, 75], strides = [1, 1]} : vector<1x76xf32> to vector<1x75xf32>
    %29 = tpu.concatenate %27, %28 in 1 : vector<1x1xf32>, vector<1x75xf32> -> vector<1x76xf32>
    %cst_12 = arith.constant 0.000000e+00 : f32
    %30 = vector.broadcast %cst_12 : f32 to vector<1x1xf32>
    %31 = vector.extract_strided_slice %20 {offsets = [0, 0], sizes = [1, 75], strides = [1, 1]} : vector<1x76xf32> to vector<1x75xf32>
    %32 = tpu.concatenate %30, %31 in 1 : vector<1x1xf32>, vector<1x75xf32> -> vector<1x76xf32>
    %cst_13 = arith.constant 0.000000e+00 : f32
    %33 = vector.broadcast %cst_13 : f32 to vector<1x1xf32>
    %34 = vector.extract_strided_slice %23 {offsets = [0, 0], sizes = [1, 75], strides = [1, 1]} : vector<1x76xf32> to vector<1x75xf32>
    %35 = tpu.concatenate %33, %34 in 1 : vector<1x1xf32>, vector<1x75xf32> -> vector<1x76xf32>
    %cst_14 = arith.constant 0.000000e+00 : f32
    %36 = vector.broadcast %cst_14 : f32 to vector<1x2xf32>
    %37 = vector.extract_strided_slice %14 {offsets = [0, 0], sizes = [1, 74], strides = [1, 1]} : vector<1x76xf32> to vector<1x74xf32>
    %38 = tpu.concatenate %36, %37 in 1 : vector<1x2xf32>, vector<1x74xf32> -> vector<1x76xf32>
    %cst_15 = arith.constant 0.000000e+00 : f32
    %39 = vector.broadcast %cst_15 : f32 to vector<1x2xf32>
    %40 = vector.extract_strided_slice %17 {offsets = [0, 0], sizes = [1, 74], strides = [1, 1]} : vector<1x76xf32> to vector<1x74xf32>
    %41 = tpu.concatenate %39, %40 in 1 : vector<1x2xf32>, vector<1x74xf32> -> vector<1x76xf32>
    %cst_16 = arith.constant 0.000000e+00 : f32
    %42 = vector.broadcast %cst_16 : f32 to vector<1x2xf32>
    %43 = vector.extract_strided_slice %20 {offsets = [0, 0], sizes = [1, 74], strides = [1, 1]} : vector<1x76xf32> to vector<1x74xf32>
    %44 = tpu.concatenate %42, %43 in 1 : vector<1x2xf32>, vector<1x74xf32> -> vector<1x76xf32>
    %cst_17 = arith.constant 0.000000e+00 : f32
    %45 = vector.broadcast %cst_17 : f32 to vector<1x2xf32>
    %46 = vector.extract_strided_slice %23 {offsets = [0, 0], sizes = [1, 74], strides = [1, 1]} : vector<1x76xf32> to vector<1x74xf32>
    %47 = tpu.concatenate %45, %46 in 1 : vector<1x2xf32>, vector<1x74xf32> -> vector<1x76xf32>
    %48 = tpu.concatenate %14, %17, %20, %23, %26, %29, %32, %35, %38, %41, %44, %47 in 0 : vector<1x76xf32>, vector<1x76xf32>, vector<1x76xf32>, vector<1x76xf32>, vector<1x76xf32>, vector<1x76xf32>, vector<1x76xf32>, vector<1x76xf32>, vector<1x76xf32>, vector<1x76xf32>, vector<1x76xf32>, vector<1x76xf32> -> vector<12x76xf32>
    %c0_18 = arith.constant 0 : index
    %c0_19 = arith.constant 0 : index
    %49 = vector.load %arg4[%c0_18, %c0_19] : memref<32x204xf32, #tpu.memory_space<vmem>>, vector<32x12xf32>
    %cst_20 = arith.constant dense<0.000000e+00> : vector<32x76xf32>
    %50 = tpu.matmul %49, %48, %cst_20 {dimension_numbers = #tpu.dot_dimension_numbers<[1], [0], [0], [1], [0, 0, 1, 1], [], []>} : vector<32x12xf32>, vector<12x76xf32>, vector<32x76xf32> -> vector<32x76xf32>
    %c0_21 = arith.constant 0 : index
    %c0_22 = arith.constant 0 : index
    %51 = vector.load %arg6[%c0_21, %c0_22] : memref<32x8xf32, #tpu.memory_space<vmem>>, vector<32x1xf32>
    %c0_23 = arith.constant 0 : index
    %c1 = arith.constant 1 : index
    %52 = vector.load %arg6[%c0_23, %c1] : memref<32x8xf32, #tpu.memory_space<vmem>>, vector<32x1xf32>
    %cst_24 = arith.constant 1.000000e+00 : f32
    %53 = vector.broadcast %cst_24 : f32 to vector<1x36xf32>
    %cst_25 = arith.constant 0.000000e+00 : f32
    %54 = vector.broadcast %cst_25 : f32 to vector<1x2xf32>
    %55 = tpu.concatenate %53, %54, %53, %54 in 1 : vector<1x36xf32>, vector<1x2xf32>, vector<1x36xf32>, vector<1x2xf32> -> vector<1x76xf32>
    %56 = vector.broadcast %51 : vector<32x1xf32> to vector<32x76xf32>
    %57 = arith.mulf %50, %56 : vector<32x76xf32>
    %58 = vector.broadcast %52 : vector<32x1xf32> to vector<32x76xf32>
    %59 = arith.addf %57, %58 : vector<32x76xf32>
    %cst_26 = arith.constant 0.000000e+00 : f32
    %60 = vector.broadcast %cst_26 : f32 to vector<32x76xf32>
    %61 = arith.cmpf oge, %59, %60 : vector<32x76xf32>
    %cst_27 = arith.constant 2.000000e-01 : f32
    %62 = vector.broadcast %cst_27 : f32 to vector<32x76xf32>
    %63 = arith.mulf %62, %59 : vector<32x76xf32>
    %64 = arith.select %61, %59, %63 : vector<32x76xi1>, vector<32x76xf32>
    %65 = vector.broadcast %55 : vector<1x76xf32> to vector<32x76xf32>
    %66 = arith.mulf %64, %65 : vector<32x76xf32>
    %cst_28 = arith.constant 0.000000e+00 : f32
    %67 = vector.broadcast %cst_28 : f32 to vector<32x1xf32>
    %68 = vector.extract_strided_slice %66 {offsets = [0, 0], sizes = [32, 75], strides = [1, 1]} : vector<32x76xf32> to vector<32x75xf32>
    %69 = tpu.concatenate %67, %68 in 1 : vector<32x1xf32>, vector<32x75xf32> -> vector<32x76xf32>
    %cst_29 = arith.constant 0.000000e+00 : f32
    %70 = vector.broadcast %cst_29 : f32 to vector<32x2xf32>
    %71 = vector.extract_strided_slice %66 {offsets = [0, 0], sizes = [32, 74], strides = [1, 1]} : vector<32x76xf32> to vector<32x74xf32>
    %72 = tpu.concatenate %70, %71 in 1 : vector<32x2xf32>, vector<32x74xf32> -> vector<32x76xf32>
    %73 = tpu.concatenate %66, %69, %72 in 0 : vector<32x76xf32>, vector<32x76xf32>, vector<32x76xf32> -> vector<96x76xf32>
    %c0_30 = arith.constant 0 : index
    %c12 = arith.constant 12 : index
    %74 = vector.load %arg4[%c0_30, %c12] : memref<32x204xf32, #tpu.memory_space<vmem>>, vector<32x96xf32>
    %cst_31 = arith.constant dense<0.000000e+00> : vector<32x76xf32>
    %75 = tpu.matmul %74, %73, %cst_31 {dimension_numbers = #tpu.dot_dimension_numbers<[1], [0], [0], [1], [0, 0, 1, 1], [], []>} : vector<32x96xf32>, vector<96x76xf32>, vector<32x76xf32> -> vector<32x76xf32>
    %c0_32 = arith.constant 0 : index
    %c2 = arith.constant 2 : index
    %76 = vector.load %arg6[%c0_32, %c2] : memref<32x8xf32, #tpu.memory_space<vmem>>, vector<32x1xf32>
    %c0_33 = arith.constant 0 : index
    %c3 = arith.constant 3 : index
    %77 = vector.load %arg6[%c0_33, %c3] : memref<32x8xf32, #tpu.memory_space<vmem>>, vector<32x1xf32>
    %78 = vector.broadcast %76 : vector<32x1xf32> to vector<32x76xf32>
    %79 = arith.mulf %75, %78 : vector<32x76xf32>
    %80 = vector.broadcast %77 : vector<32x1xf32> to vector<32x76xf32>
    %81 = arith.addf %79, %80 : vector<32x76xf32>
    %cst_34 = arith.constant 0.000000e+00 : f32
    %82 = vector.broadcast %cst_34 : f32 to vector<32x76xf32>
    %83 = arith.cmpf oge, %81, %82 : vector<32x76xf32>
    %cst_35 = arith.constant 2.000000e-01 : f32
    %84 = vector.broadcast %cst_35 : f32 to vector<32x76xf32>
    %85 = arith.mulf %84, %81 : vector<32x76xf32>
    %86 = arith.select %83, %81, %85 : vector<32x76xi1>, vector<32x76xf32>
    %87 = vector.extract_strided_slice %86 {offsets = [0, 1], sizes = [32, 75], strides = [1, 1]} : vector<32x76xf32> to vector<32x75xf32>
    %cst_36 = arith.constant 0.000000e+00 : f32
    %88 = vector.broadcast %cst_36 : f32 to vector<32x1xf32>
    %89 = tpu.concatenate %87, %88 in 1 : vector<32x75xf32>, vector<32x1xf32> -> vector<32x76xf32>
    %90 = vector.extract_strided_slice %86 {offsets = [0, 2], sizes = [32, 74], strides = [1, 1]} : vector<32x76xf32> to vector<32x74xf32>
    %cst_37 = arith.constant 0.000000e+00 : f32
    %91 = vector.broadcast %cst_37 : f32 to vector<32x2xf32>
    %92 = tpu.concatenate %90, %91 in 1 : vector<32x74xf32>, vector<32x2xf32> -> vector<32x76xf32>
    %93 = tpu.concatenate %86, %89, %92 in 0 : vector<32x76xf32>, vector<32x76xf32>, vector<32x76xf32> -> vector<96x76xf32>
    %c0_38 = arith.constant 0 : index
    %c108 = arith.constant 108 : index
    %94 = vector.load %arg4[%c0_38, %c108] : memref<32x204xf32, #tpu.memory_space<vmem>>, vector<32x96xf32>
    %cst_39 = arith.constant dense<0.000000e+00> : vector<32x76xf32>
    %95 = tpu.matmul %94, %93, %cst_39 {dimension_numbers = #tpu.dot_dimension_numbers<[1], [0], [0], [1], [0, 0, 1, 1], [], []>} : vector<32x96xf32>, vector<96x76xf32>, vector<32x76xf32> -> vector<32x76xf32>
    %c0_40 = arith.constant 0 : index
    %c4 = arith.constant 4 : index
    %96 = vector.load %arg6[%c0_40, %c4] : memref<32x8xf32, #tpu.memory_space<vmem>>, vector<32x1xf32>
    %97 = vector.broadcast %96 : vector<32x1xf32> to vector<32x76xf32>
    %98 = arith.addf %95, %97 : vector<32x76xf32>
    %99 = vector.extract_strided_slice %98 {offsets = [0, 1], sizes = [32, 75], strides = [1, 1]} : vector<32x76xf32> to vector<32x75xf32>
    %cst_41 = arith.constant 0.000000e+00 : f32
    %100 = vector.broadcast %cst_41 : f32 to vector<32x1xf32>
    %101 = tpu.concatenate %99, %100 in 1 : vector<32x75xf32>, vector<32x1xf32> -> vector<32x76xf32>
    %102 = vector.extract_strided_slice %98 {offsets = [0, 2], sizes = [32, 74], strides = [1, 1]} : vector<32x76xf32> to vector<32x74xf32>
    %cst_42 = arith.constant 0.000000e+00 : f32
    %103 = vector.broadcast %cst_42 : f32 to vector<32x2xf32>
    %104 = tpu.concatenate %102, %103 in 1 : vector<32x74xf32>, vector<32x2xf32> -> vector<32x76xf32>
    %105 = tpu.concatenate %98, %101, %104 in 0 : vector<32x76xf32>, vector<32x76xf32>, vector<32x76xf32> -> vector<96x76xf32>
    %c0_43 = arith.constant 0 : index
    %c0_44 = arith.constant 0 : index
    %106 = vector.load %arg5[%c0_43, %c0_44] : memref<16x96xf32, #tpu.memory_space<vmem>>, vector<16x96xf32>
    %cst_45 = arith.constant dense<0.000000e+00> : vector<16x76xf32>
    %107 = tpu.matmul %106, %105, %cst_45 {dimension_numbers = #tpu.dot_dimension_numbers<[1], [0], [0], [1], [0, 0, 1, 1], [], []>} : vector<16x96xf32>, vector<96x76xf32>, vector<16x76xf32> -> vector<16x76xf32>
    %c0_46 = arith.constant 0 : index
    %c5 = arith.constant 5 : index
    %108 = vector.load %arg6[%c0_46, %c5] : memref<32x8xf32, #tpu.memory_space<vmem>>, vector<16x1xf32>
    %109 = vector.broadcast %108 : vector<16x1xf32> to vector<16x76xf32>
    %110 = arith.addf %107, %109 : vector<16x76xf32>
    %c0_47 = arith.constant 0 : index
    %c0_48 = arith.constant 0 : index
    %111 = vector.load %arg7[%c0_47, %c0_48] : memref<16x76xf32, #tpu.memory_space<vmem>>, vector<16x76xf32>
    tpu.vector_store %arg7[%c0_47, %c0_48], %110 {strides = array<i32>} : memref<16x76xf32, #tpu.memory_space<vmem>>, vector<16x76xf32>,
    return
  }
}

</mosaic_0001>

<llo_original>
// kernel: pose_decoder_conv_forward.1
$region0: #{pose_decoder_conv_forward.1}
  #allocation0 [shape = 'u32[]', space=smem, size = 0x4, offset = 0x4, fixed_abs, tag = 'smem constant byte address 0x4 - core index']
  #allocation1 [shape = 'u32[144,128]{1,0:T(1,128)}', space=vmem, size = 0x12000, scoped, tag = 'internal scratch']
  %s0 = inlined_call_operand.vmem [shape: f32[2,32], index: 0, kind: input, shape index: {}]
  %s1 = inlined_call_operand.vmem [shape: f32[32,64], index: 1, kind: input, shape index: {}]
  %s2 = inlined_call_operand.hbm [shape: f32[64,136], index: 2, kind: input, shape index: {}]
  %s3 = inlined_call_operand.hbm [shape: f32[1,200], index: 3, kind: input, shape index: {}]
  %s4 = inlined_call_operand.hbm [shape: f32[32,204], index: 4, kind: input, shape index: {}]
  %s5 = inlined_call_operand.vmem [shape: f32[16,96], index: 5, kind: input, shape index: {}]
  %s6 = inlined_call_operand.vmem [shape: f32[32,8], index: 6, kind: input, shape index: {}]
  %s7 = inlined_call_operand.vmem [shape: f32[16,76], index: 7, kind: output, shape index: {}]
  %s8 = sld [smem:[#allocation0]]
  $region50: #{pose_decoder_conv_forward.1} parent=0
    _
  %s10 = ssub.s32 1, %s8
  %s11 = scalar_select 0, %s10, %s8
  $region1: #{pose_decoder_conv_forward.1} parent=0
    #allocation2 [shape = 'u8[65536]{0}', space=vmem, size = 0x10000, scoped, tag = 'input window, operand 2, single buffered']
    #allocation3 [shape = 's32[1]{0}', space=sflag, size = 0x4, scoped, tag = 'scoped memory for pose_decoder_conv_forward.1']
    #allocation4 [shape = 'u8[1024]{0}', space=vmem, size = 0x400, scoped, tag = 'input window, operand 3, single buffered']
    #allocation5 [shape = 's32[1]{0}', space=sflag, size = 0x4, scoped, tag = 'scoped memory for pose_decoder_conv_forward.1']
    #allocation6 [shape = 'u8[32768]{0}', space=vmem, size = 0x8000, scoped, tag = 'input window, operand 4, single buffered']
    %12 = vsyncpa [#allocation3], 0
    %13 = vsyncpa [#allocation5], 0
    // Predicated region
    $region2: #{pose_decoder_conv_forward.1} parent=1 // pred_check
      _
    $region3: #{pose_decoder_conv_forward.1} parent=1 // pred_check_branch
      %15 = sbr.rel (0) target = $region5
    $region4: #{pose_decoder_conv_forward.1} parent=1 // pred_region
      _
    $region5: #{pose_decoder_conv_forward.1} parent=1 // pred_fallthru
      _
    // Predicated region
    $region6: #{pose_decoder_conv_forward.1} parent=1 // pred_check
      _
    $region7: #{pose_decoder_conv_forward.1} parent=1 // pred_check_branch
      %17 = sbr.rel (0) target = $region9
    $region8: #{pose_decoder_conv_forward.1} parent=1 // pred_region
      _
    $region9: #{pose_decoder_conv_forward.1} parent=1 // pred_fallthru
      _
    // Predicated region
    $region10: #{pose_decoder_conv_forward.1} parent=1 // pred_check
      _
    $region11: #{pose_decoder_conv_forward.1} parent=1 // pred_check_branch
      %19 = sbr.rel (0) target = $region13
    $region12: #{pose_decoder_conv_forward.1} parent=1 // pred_region
      %s21 = ssub.s32 2048, 2048
      %22 = vsyncadd [#allocation3], %s21
      %s23 = sshll.u32 [#allocation2], 4
      %s24 = int_to_ptr.vmem [resolvable:$true] %s23
      %29 = dma.hbm_to_vmem [thread:$0]  %s2, 2048, %s24, [#allocation3], 256, 256, 16
    $region13: #{pose_decoder_conv_forward.1} parent=1 // pred_fallthru
      _
    // Predicated region
    $region14: #{pose_decoder_conv_forward.1} parent=1 // pred_check
      _
    $region15: #{pose_decoder_conv_forward.1} parent=1 // pred_check_branch
      %31 = sbr.rel (0) target = $region17
    $region16: #{pose_decoder_conv_forward.1} parent=1 // pred_region
      %s33 = ssub.s32 32, 32
      %34 = vsyncadd [#allocation5], %s33
      %s36 = sshll.u32 [#allocation4], 4
      %s37 = int_to_ptr.vmem [resolvable:$true] %s36
      %39 = dma.hbm_to_vmem [thread:$0]  %s3, 32, %s37, [#allocation5]
    $region17: #{pose_decoder_conv_forward.1} parent=1 // pred_fallthru
      _
    // Predicated region
    $region18: #{pose_decoder_conv_forward.1} parent=1 // pred_check
      _
    $region19: #{pose_decoder_conv_forward.1} parent=1 // pred_check_branch
      %41 = sbr.rel (0) target = $region21
    $region20: #{pose_decoder_conv_forward.1} parent=1 // pred_region
      %s43 = ssub.s32 1024, 1024
      %44 = vsyncadd [#allocation5], %s43
      %s45 = sshll.u32 [#allocation6], 4
      %s46 = int_to_ptr.vmem [resolvable:$true] %s45
      %51 = dma.hbm_to_vmem [thread:$0]  %s4, 1024, %s46, [#allocation5], 256, 256, 16
    $region21: #{pose_decoder_conv_forward.1} parent=1 // pred_fallthru
      _
    // Predicated region
    $region22: #{pose_decoder_conv_forward.1} parent=1 // pred_check
      _
    $region23: #{pose_decoder_conv_forward.1} parent=1 // pred_check_branch
      %53 = sbr.rel (0) target = $region25
    $region24: #{pose_decoder_conv_forward.1} parent=1 // pred_region
      _
    $region25: #{pose_decoder_conv_forward.1} parent=1 // pred_fallthru
      _
    // Predicated region
    $region26: #{pose_decoder_conv_forward.1} parent=1 // pred_check
      _
    $region27: #{pose_decoder_conv_forward.1} parent=1 // pred_check_branch
      %55 = sbr.rel (0) target = $region29
    $region28: #{pose_decoder_conv_forward.1} parent=1 // pred_region
      _
    $region29: #{pose_decoder_conv_forward.1} parent=1 // pred_fallthru
      _
    // Predicated region
    $region30: #{pose_decoder_conv_forward.1} parent=1 // pred_check
      _
    $region31: #{pose_decoder_conv_forward.1} parent=1 // pred_check_branch
      %57 = sbr.rel (0) target = $region33
    $region32: #{pose_decoder_conv_forward.1} parent=1 // pred_region
      %58 = dma.done [#allocation3], 2048
    $region33: #{pose_decoder_conv_forward.1} parent=1 // pred_fallthru
      _
    // Predicated region
    $region34: #{pose_decoder_conv_forward.1} parent=1 // pred_check
      _
    $region35: #{pose_decoder_conv_forward.1} parent=1 // pred_check_branch
      %60 = sbr.rel (0) target = $region37
    $region36: #{pose_decoder_conv_forward.1} parent=1 // pred_region
      %61 = dma.done [#allocation5], 32
    $region37: #{pose_decoder_conv_forward.1} parent=1 // pred_fallthru
      _
    // Predicated region
    $region38: #{pose_decoder_conv_forward.1} parent=1 // pred_check
      _
    $region39: #{pose_decoder_conv_forward.1} parent=1 // pred_check_branch
      %63 = sbr.rel (0) target = $region41
    $region40: #{pose_decoder_conv_forward.1} parent=1 // pred_region
      %64 = dma.done [#allocation5], 1024
    $region41: #{pose_decoder_conv_forward.1} parent=1 // pred_fallthru
      _
    %v65 = vld [vmem:[%s0] sm:$0x3]
    %v66 = vld [vmem:[%s1] sm:$0xff]
    %v67 = vld [vmem:[%s1 + $0x8] sm:$0xff]
    %v68 = vld [vmem:[%s1 + $0x10] sm:$0xff]
    %v69 = vld [vmem:[%s1 + $0x18] sm:$0xff]
    %v70 = vld [vmem:[#allocation4] sm:$0x1]
    %v72 = vlaneseq
    %v73 = vshrl.u32 %v72, 7
    %v74 = vsub.s32 0, %v73
    %v75 = vrot.slane %v70, %v74
    %vm77 = vcmask 261120
    %v79 = vsel %vm77, %v65, 0
    %81 = vmatprep.subr.mxu0 0.0
    %82 = vmatpush1.msra.mxu0 %v66
    %83 = vmatprep.subr.mxu0 0.0
    %84 = vmatpush1.msra.mxu0 %v67
    %85 = vmatprep.subr.mxu0 0.0
    %86 = vmatpush1.msra.mxu0 %v68
    %87 = vmatprep.subr.mxu0 0.0
    %88 = vmatpush1.msra.mxu0 %v69
    %89 = vmatprep.subr.mxu0 0.0
    %90 = vmatpush1.msra.mxu0 0.0
    %91 = vmatprep.subr.mxu0 0.0
    %92 = vmatpush1.msra.mxu0 0.0
    %93 = vmatprep.subr.mxu0 0.0
    %94 = vmatpush1.msra.mxu0 0.0
    %95 = vmatprep.subr.mxu0 0.0
    %96 = vmatpush1.msra.mxu0 0.0
    %97 = vmatprep.subr.mxu0 0.0
    %98 = vmatpush1.msra.mxu0 0.0
    %99 = vmatprep.subr.mxu0 0.0
    %100 = vmatpush1.msra.mxu0 0.0
    %101 = vmatprep.subr.mxu0 0.0
    %102 = vmatpush1.msra.mxu0 0.0
    %103 = vmatprep.subr.mxu0 0.0
    %104 = vmatpush1.msra.mxu0 0.0
    %105 = vmatprep.subr.mxu0 0.0
    %106 = vmatpush1.msra.mxu0 0.0
    %107 = vmatprep.subr.mxu0 0.0
    %108 = vmatpush1.msra.mxu0 0.0
    %109 = vmatprep.subr.mxu0 0.0
    %110 = vmatpush1.msra.mxu0 0.0
    %111 = vmatprep.subr.mxu0 0.0
    %112 = vmatpush1.msra.mxu0 0.0
    %113 = vmatprep.subr.mxu0 0.0
    %114 = vmatpush1.msra.mxu0 0.0
    %115 = vmatprep.subr.mxu0 0.0
    %116 = vmatpush1.msra.mxu0 0.0
    %117 = vmatprep.subr.mxu0 0.0
    %118 = vmatpush1.msra.mxu0 0.0
    %119 = vmatprep.subr.mxu0 0.0
    %120 = vmatpush1.msra.mxu0 0.0
    %121 = vmatprep.subr.mxu0 0.0
    %122 = vmatpush1.msra.mxu0 0.0
    %123 = vmatprep.subr.mxu0 0.0
    %124 = vmatpush1.msra.mxu0 0.0
    %125 = vmatprep.subr.mxu0 0.0
    %126 = vmatpush1.msra.mxu0 0.0
    %127 = vmatprep.subr.mxu0 0.0
    %128 = vmatpush1.msra.mxu0 0.0
    %129 = vmatprep.subr.mxu0 0.0
    %130 = vmatpush1.msra.mxu0 0.0
    %131 = vmatprep.subr.mxu0 0.0
    %132 = vmatpush1.msra.mxu0 0.0
    %133 = vmatprep.subr.mxu0 0.0
    %134 = vmatpush1.msra.mxu0 0.0
    %135 = vmatprep.subr.mxu0 0.0
    %136 = vmatpush1.msra.mxu0 0.0
    %137 = vmatprep.subr.mxu0 0.0
    %138 = vmatpush1.msra.mxu0 0.0
    %139 = vmatprep.subr.mxu0 0.0
    %140 = vmatpush1.msra.mxu0 0.0
    %141 = vmatprep.subr.mxu0 0.0
    %142 = vmatpush1.msra.mxu0 0.0
    %143 = vmatprep.subr.mxu0 0.0
    %144 = vmatpush1.msra.mxu0 0.0
    %145 = vmatprep.mubr.f32.mxu0 0.0
    %146 = vmatmul.mubr.f32.gmra.mrb[0].mxu0 %v79
    %v147 = vpop.f32.mrb[0].mxu0
    %v148 = vadd.f32 %v75, %v147
    %v149 = vpop.f32.mrb[0].mxu0
    %150 = vdwg.mxu0
    %v151 = vld [vmem:[#allocation2] sm:$0xff]
    %v152 = vld [vmem:[#allocation2 + $0x8] sm:$0xff]
    %v153 = vld [vmem:[#allocation2 + $0x10] sm:$0xff]
    %v154 = vld [vmem:[#allocation2 + $0x18] sm:$0xff]
    %v155 = vld [vmem:[#allocation2 + $0x20] sm:$0xff]
    %v156 = vld [vmem:[#allocation2 + $0x28] sm:$0xff]
    %v157 = vld [vmem:[#allocation2 + $0x30] sm:$0xff]
    %v158 = vld [vmem:[#allocation2 + $0x38] sm:$0xff]
    %v159 = vld [vmem:[#allocation2 + $0x40] sm:$0xff]
    %v160 = vld [vmem:[#allocation2 + $0x48] sm:$0xff]
    %v161 = vld [vmem:[#allocation2 + $0x50] sm:$0xff]
    %v162 = vld [vmem:[#allocation2 + $0x58] sm:$0xff]
    %v163 = vld [vmem:[#allocation2 + $0x60] sm:$0xff]
    %v164 = vld [vmem:[#allocation2 + $0x68] sm:$0xff]
    %v165 = vld [vmem:[#allocation2 + $0x70] sm:$0xff]
    %v166 = vld [vmem:[#allocation2 + $0x78] sm:$0xff]
    %v167 = vld [vmem:[#allocation4] sm:$0x3]
    %v169 = vlaneseq
    %v170 = vshrl.u32 %v169, 7
    %v171 = vsub.s32 0, %v170
    %v172 = vrot.slane %v167, %v171
    %v173 = vlaneseq
    %v174 = vshrl.u32 %v173, 7
    %v175 = vsub.s32 1, %v174
    %v176 = vrot.slane %v167, %v175
    %177 = vrot.lane.b32.xlu0 %v172, 64
    %v178 = vpop.permute.xlu0 %177
    %179 = vrot.lane.b32.xlu0 %v176, 64
    %v180 = vpop.permute.xlu0 %179
    %vm181 = vcmask 523264
    %v182 = vsel %vm181, %v178, %v180
    %v186 = vsel %vm181, %v148, 0
    %188 = vmatprep.subr.mxu0 %v152
    %189 = vmatpush1.msra.mxu0 %v151
    %190 = vmatprep.subr.mxu0 %v154
    %191 = vmatpush1.msra.mxu0 %v153
    %192 = vmatprep.subr.mxu0 %v156
    %193 = vmatpush1.msra.mxu0 %v155
    %194 = vmatprep.subr.mxu0 %v158
    %195 = vmatpush1.msra.mxu0 %v157
    %196 = vmatprep.subr.mxu0 %v160
    %197 = vmatpush1.msra.mxu0 %v159
    %198 = vmatprep.subr.mxu0 %v162
    %199 = vmatpush1.msra.mxu0 %v161
    %200 = vmatprep.subr.mxu0 %v164
    %201 = vmatpush1.msra.mxu0 %v163
    %202 = vmatprep.subr.mxu0 %v166
    %203 = vmatpush1.msra.mxu0 %v165
    %204 = vmatprep.subr.mxu0 0.0
    %205 = vmatpush1.msra.mxu0 0.0
    %206 = vmatprep.subr.mxu0 0.0
    %207 = vmatpush1.msra.mxu0 0.0
    %208 = vmatprep.subr.mxu0 0.0
    %209 = vmatpush1.msra.mxu0 0.0
    %210 = vmatprep.subr.mxu0 0.0
    %211 = vmatpush1.msra.mxu0 0.0
    %212 = vmatprep.subr.mxu0 0.0
    %213 = vmatpush1.msra.mxu0 0.0
    %214 = vmatprep.subr.mxu0 0.0
    %215 = vmatpush1.msra.mxu0 0.0
    %216 = vmatprep.subr.mxu0 0.0
    %217 = vmatpush1.msra.mxu0 0.0
    %218 = vmatprep.subr.mxu0 0.0
    %219 = vmatpush1.msra.mxu0 0.0
    %220 = vmatprep.subr.mxu0 0.0
    %221 = vmatpush1.msra.mxu0 0.0
    %222 = vmatprep.subr.mxu0 0.0
    %223 = vmatpush1.msra.mxu0 0.0
    %224 = vmatprep.subr.mxu0 0.0
    %225 = vmatpush1.msra.mxu0 0.0
    %226 = vmatprep.subr.mxu0 0.0
    %227 = vmatpush1.msra.mxu0 0.0
    %228 = vmatprep.subr.mxu0 0.0
    %229 = vmatpush1.msra.mxu0 0.0
    %230 = vmatprep.subr.mxu0 0.0
    %231 = vmatpush1.msra.mxu0 0.0
    %232 = vmatprep.subr.mxu0 0.0
    %233 = vmatpush1.msra.mxu0 0.0
    %234 = vmatprep.subr.mxu0 0.0
    %235 = vmatpush1.msra.mxu0 0.0
    %236 = vmatprep.subr.mxu0 0.0
    %237 = vmatpush1.msra.mxu0 0.0
    %238 = vmatprep.subr.mxu0 0.0
    %239 = vmatpush1.msra.mxu0 0.0
    %240 = vmatprep.subr.mxu0 0.0
    %241 = vmatpush1.msra.mxu0 0.0
    %242 = vmatprep.subr.mxu0 0.0
    %243 = vmatpush1.msra.mxu0 0.0
    %244 = vmatprep.subr.mxu0 0.0
    %245 = vmatpush1.msra.mxu0 0.0
    %246 = vmatprep.subr.mxu0 0.0
    %247 = vmatpush1.msra.mxu0 0.0
    %248 = vmatprep.subr.mxu0 0.0
    %249 = vmatpush1.msra.mxu0 0.0
    %250 = vmatprep.subr.mxu0 0.0
    %251 = vmatpush1.msra.mxu0 0.0
    %252 = vmatprep.mubr.f32.mxu0 0.0
    %253 = vmatmul.mubr.f32.gmra.mrb[0].mxu0 %v186
    %v254 = vpop.f32.mrb[0].mxu0
    %v255 = vadd.f32 %v182, %v254
    %v256 = vpop.f32.mrb[0].mxu0
    %v257 = vadd.f32 %v180, %v256
    %258 = vdwg.mxu0
    %v260 = vrot.slane %v255, 1
    %261 = vrot.lane.b32.xlu0 %v260, 38
    %v262 = vpop.permute.xlu0 %261
    %vm264 = vcmask 277504
    %v265 = vsel %vm264, %v255, 0.0
    %vm266 = vcmask 310272
    %v267 = vsel %vm266, %v265, %v262
    %vm268 = vcmask 588800
    %v269 = vsel %vm268, %v267, 0.0
    %270 = vrot.lane.b32.xlu0 %v255, 94
    %v271 = vpop.permute.xlu0 %270
    %273 = vrot.lane.b32.xlu0 %v260, 4
    %v274 = vpop.permute.xlu0 %273
    %v276 = vsel %vm264, %v271, 0.0
    %v277 = vsel %vm266, %v276, %v274
    %v278 = vsel %vm268, %v277, 0.0
    %279 = vrot.lane.b32.xlu0 %v255, 60
    %v280 = vpop.permute.xlu0 %279
    %282 = vrot.lane.b32.xlu0 %v260, 98
    %v283 = vpop.permute.xlu0 %282
    %v285 = vsel %vm264, %v280, 0.0
    %v286 = vsel %vm266, %v285, %v283
    %v287 = vsel %vm268, %v286, 0.0
    %289 = vrot.lane.b32.xlu0 %v255, 26
    %v290 = vpop.permute.xlu0 %289
    %291 = vrot.lane.b32.xlu0 %v257, 26
    %v292 = vpop.permute.xlu0 %291
    %vm293 = vcmask 211968
    %v294 = vsel %vm293, %v290, %v292
    %v296 = vrot.slane %v257, 1
    %297 = vrot.lane.b32.xlu0 %v260, 64
    %v298 = vpop.permute.xlu0 %297
    %299 = vrot.lane.b32.xlu0 %v296, 64
    %v300 = vpop.permute.xlu0 %299
    %v301 = vsel %vm181, %v298, %v300
    %v303 = vsel %vm264, %v294, 0.0
    %v304 = vsel %vm266, %v303, %v301
    %v305 = vsel %vm268, %v304, 0.0
    %307 = vrot.lane.b32.xlu0 %v269, 1
    %v308 = vpop.permute.xlu0 %307
    %vm310 = vcmask 7168
    %v311 = vsel %vm310, 0.0, %v308
    %313 = vrot.lane.b32.xlu0 %v278, 1
    %v314 = vpop.permute.xlu0 %313
    %v316 = vsel %vm310, 0.0, %v314
    %318 = vrot.lane.b32.xlu0 %v287, 1
    %v319 = vpop.permute.xlu0 %318
    %v321 = vsel %vm310, 0.0, %v319
    %323 = vrot.lane.b32.xlu0 %v305, 1
    %v324 = vpop.permute.xlu0 %323
    %v326 = vsel %vm310, 0.0, %v324
    %327 = vrot.lane.b32.xlu0 %v269, 2
    %v328 = vpop.permute.xlu0 %327
    %vm330 = vcmask 15360
    %v331 = vsel %vm330, 0.0, %v328
    %332 = vrot.lane.b32.xlu0 %v278, 2
    %v333 = vpop.permute.xlu0 %332
    %v335 = vsel %vm330, 0.0, %v333
    %336 = vrot.lane.b32.xlu0 %v287, 2
    %v337 = vpop.permute.xlu0 %336
    %v339 = vsel %vm330, 0.0, %v337
    %340 = vrot.lane.b32.xlu0 %v305, 2
    %v341 = vpop.permute.xlu0 %340
    %v343 = vsel %vm330, 0.0, %v341
    %v344 = vrot.slane %v278, 7
    %v346 = vrot.slane %v287, 6
    %v348 = vrot.slane %v305, 5
    %v351 = vrot.slane %v311, 4
    %v354 = vrot.slane %v316, 3
    %v357 = vrot.slane %v321, 2
    %v360 = vrot.slane %v326, 1
    %v363 = vrot.slane %v335, 7
    %v366 = vrot.slane %v339, 6
    %v369 = vrot.slane %v343, 5
    %vm371 = vcmask 1040384
    %v372 = vsel %vm371, %v269, %v344
    %vm373 = vcmask 1041408
    %v374 = vsel %vm373, %v372, %v346
    %vm375 = vcmask 1042432
    %v376 = vsel %vm375, %v374, %v348
    %vm377 = vcmask 1043456
    %v378 = vsel %vm377, %v376, %v351
    %vm379 = vcmask 1044480
    %v380 = vsel %vm379, %v378, %v354
    %vm381 = vcmask 1045504
    %v382 = vsel %vm381, %v380, %v357
    %vm383 = vcmask 1046528
    %v384 = vsel %vm383, %v382, %v360
    %v385 = vsel %vm371, %v331, %v363
    %v386 = vsel %vm373, %v385, %v366
    %v387 = vsel %vm375, %v386, %v369
    %v388 = vld [vmem:[#allocation6] sm:$0xff]
    %v389 = vld [vmem:[#allocation6 + $0x10] sm:$0xff]
    %v390 = vld [vmem:[#allocation6 + $0x20] sm:$0xff]
    %v391 = vld [vmem:[#allocation6 + $0x30] sm:$0xff]
    %vm392 = vcmask 97280
    %v394 = vsel %vm392, %v388, 0
    %v397 = vsel %vm392, %v389, 0
    %v400 = vsel %vm392, %v390, 0
    %v403 = vsel %vm392, %v391, 0
    %v406 = vsel %vm377, %v387, 0
    %408 = vmatprep.subr.mxu0 0.0
    %409 = vmatpush1.msra.mxu0 %v384
    %410 = vmatprep.subr.mxu0 0.0
    %411 = vmatpush1.msra.mxu0 %v406
    %412 = vmatprep.subr.mxu0 0.0
    %413 = vmatpush1.msra.mxu0 0.0
    %414 = vmatprep.subr.mxu0 0.0
    %415 = vmatpush1.msra.mxu0 0.0
    %416 = vmatprep.subr.mxu0 0.0
    %417 = vmatpush1.msra.mxu0 0.0
    %418 = vmatprep.subr.mxu0 0.0
    %419 = vmatpush1.msra.mxu0 0.0
    %420 = vmatprep.subr.mxu0 0.0
    %421 = vmatpush1.msra.mxu0 0.0
    %422 = vmatprep.subr.mxu0 0.0
    %423 = vmatpush1.msra.mxu0 0.0
    %424 = vmatprep.subr.mxu0 0.0
    %425 = vmatpush1.msra.mxu0 0.0
    %426 = vmatprep.subr.mxu0 0.0
    %427 = vmatpush1.msra.mxu0 0.0
    %428 = vmatprep.subr.mxu0 0.0
    %429 = vmatpush1.msra.mxu0 0.0
    %430 = vmatprep.subr.mxu0 0.0
    %431 = vmatpush1.msra.mxu0 0.0
    %432 = vmatprep.subr.mxu0 0.0
    %433 = vmatpush1.msra.mxu0 0.0
    %434 = vmatprep.subr.mxu0 0.0
    %435 = vmatpush1.msra.mxu0 0.0
    %436 = vmatprep.subr.mxu0 0.0
    %437 = vmatpush1.msra.mxu0 0.0
    %438 = vmatprep.subr.mxu0 0.0
    %439 = vmatpush1.msra.mxu0 0.0
    %440 = vmatprep.subr.mxu0 0.0
    %441 = vmatpush1.msra.mxu0 0.0
    %442 = vmatprep.subr.mxu0 0.0
    %443 = vmatpush1.msra.mxu0 0.0
    %444 = vmatprep.subr.mxu0 0.0
    %445 = vmatpush1.msra.mxu0 0.0
    %446 = vmatprep.subr.mxu0 0.0
    %447 = vmatpush1.msra.mxu0 0.0
    %448 = vmatprep.subr.mxu0 0.0
    %449 = vmatpush1.msra.mxu0 0.0
    %450 = vmatprep.subr.mxu0 0.0
    %451 = vmatpush1.msra.mxu0 0.0
    %452 = vmatprep.subr.mxu0 0.0
    %453 = vmatpush1.msra.mxu0 0.0
    %454 = vmatprep.subr.mxu0 0.0
    %455 = vmatpush1.msra.mxu0 0.0
    %456 = vmatprep.subr.mxu0 0.0
    %457 = vmatpush1.msra.mxu0 0.0
    %458 = vmatprep.subr.mxu0 0.0
    %459 = vmatpush1.msra.mxu0 0.0
    %460 = vmatprep.subr.mxu0 0.0
    %461 = vmatpush1.msra.mxu0 0.0
    %462 = vmatprep.subr.mxu0 0.0
    %463 = vmatpush1.msra.mxu0 0.0
    %464 = vmatprep.subr.mxu0 0.0
    %465 = vmatpush1.msra.mxu0 0.0
    %466 = vmatprep.subr.mxu0 0.0
    %467 = vmatpush1.msra.mxu0 0.0
    %468 = vmatprep.subr.mxu0 0.0
    %469 = vmatpush1.msra.mxu0 0.0
    %470 = vmatprep.subr.mxu0 0.0
    %471 = vmatpush1.msra.mxu0 0.0
    %472 = vmatprep.mubr.f32.mxu0 0.0
    %473 = vmatmul.mubr.f32.gmra.mrb[0].mxu0 %v394
    %v474 = vpop.f32.mrb[0].mxu0
    %v475 = vadd.f32 0.0, %v474
    %v476 = vpop.f32.mrb[0].mxu0
    %477 = vmatprep.mubr.f32.mxu0 0.0
    %478 = vmatmul.mubr.f32.gmra.mrb[0].mxu0 %v397
    %v479 = vpop.f32.mrb[0].mxu0
    %v480 = vadd.f32 0.0, %v479
    %v481 = vpop.f32.mrb[0].mxu0
    %482 = vmatprep.mubr.f32.mxu0 0.0
    %483 = vmatmul.mubr.f32.gmra.mrb[0].mxu0 %v400
    %v484 = vpop.f32.mrb[0].mxu0
    %v485 = vadd.f32 0.0, %v484
    %v486 = vpop.f32.mrb[0].mxu0
    %487 = vmatprep.mubr.f32.mxu0 0.0
    %488 = vmatmul.mubr.f32.gmra.mrb[0].mxu0 %v403
    %v489 = vpop.f32.mrb[0].mxu0
    %v490 = vadd.f32 0.0, %v489
    %v491 = vpop.f32.mrb[0].mxu0
    %492 = vdwg.mxu0
    %v493 = vld [vmem:[%s6] sm:$0xff]
    %v494 = vld [vmem:[%s6 + $0x8] sm:$0xff]
    %v495 = vld [vmem:[%s6 + $0x10] sm:$0xff]
    %v496 = vld [vmem:[%s6 + $0x18] sm:$0xff]
    %vm497 = vcmask 293888
    %v498 = vsel %vm497, 1.0, 0.0
    %v499 = vsel %vm266, %v498, 1.0
    %vm500 = vcmask 605184
    %v501 = vsel %vm500, %v499, 0.0
    %503 = vset.pattern.permute.xlu0 0
    %504 = vperm.xlu0 %503, %v493
    %v505 = vpop.permute.xlu0 %504
    %508 = vset.pattern.permute.xlu0 0
    %509 = vperm.xlu0 %508, %v494
    %v510 = vpop.permute.xlu0 %509
    %513 = vset.pattern.permute.xlu0 0
    %514 = vperm.xlu0 %513, %v495
    %v515 = vpop.permute.xlu0 %514
    %518 = vset.pattern.permute.xlu0 0
    %519 = vperm.xlu0 %518, %v496
    %v520 = vpop.permute.xlu0 %519
    %v522 = vmul.f32 %v475, %v505
    %v523 = vmul.f32 %v480, %v510
    %v524 = vmul.f32 %v485, %v515
    %v525 = vmul.f32 %v490, %v520
    %526 = vset.pattern.permute.xlu0 1
    %527 = vperm.xlu0 %526, %v493
    %v528 = vpop.permute.xlu0 %527
    %530 = vset.pattern.permute.xlu0 1
    %531 = vperm.xlu0 %530, %v494
    %v532 = vpop.permute.xlu0 %531
    %534 = vset.pattern.permute.xlu0 1
    %535 = vperm.xlu0 %534, %v495
    %v536 = vpop.permute.xlu0 %535
    %538 = vset.pattern.permute.xlu0 1
    %539 = vperm.xlu0 %538, %v496
    %v540 = vpop.permute.xlu0 %539
    %v542 = vadd.f32 %v522, %v528
    %v543 = vadd.f32 %v523, %v532
    %v544 = vadd.f32 %v524, %v536
    %v545 = vadd.f32 %v525, %v540
    %vm546 = vcmp.ge.f32.partialorder %v542, 0.0
    %vm547 = vcmp.ge.f32.partialorder %v543, 0.0
    %vm548 = vcmp.ge.f32.partialorder %v544, 0.0
    %vm549 = vcmp.ge.f32.partialorder %v545, 0.0
    %v550 = vmul.f32 %v542, 0.2
    %v551 = vmul.f32 %v543, 0.2
    %v552 = vmul.f32 %v544, 0.2
    %v553 = vmul.f32 %v545, 0.2
    %v554 = vsel %vm546, %v542, %v550
    %v555 = vsel %vm547, %v543, %v551
    %v556 = vsel %vm548, %v544, %v552
    %v557 = vsel %vm549, %v545, %v553
    %v558 = vlaneseq
    %v559 = vshrl.u32 %v558, 7
    %v560 = vsub.s32 0, %v559
    %v561 = vrot.slane %v501, %v560
    %v562 = vmul.f32 %v554, %v561
    %v563 = vmul.f32 %v555, %v561
    %v564 = vmul.f32 %v556, %v561
    %v565 = vmul.f32 %v557, %v561
    %570 = vrot.lane.b32.xlu0 %v562, 1
    %v571 = vpop.permute.xlu0 %570
    %572 = vrot.lane.b32.xlu0 %v563, 1
    %v573 = vpop.permute.xlu0 %572
    %574 = vrot.lane.b32.xlu0 %v564, 1
    %v575 = vpop.permute.xlu0 %574
    %576 = vrot.lane.b32.xlu0 %v565, 1
    %v577 = vpop.permute.xlu0 %576
    %v582 = vsel %vm310, 0.0, %v571
    %v583 = vsel %vm310, 0.0, %v573
    %v584 = vsel %vm310, 0.0, %v575
    %v585 = vsel %vm310, 0.0, %v577
    %586 = vrot.lane.b32.xlu0 %v562, 2
    %v587 = vpop.permute.xlu0 %586
    %588 = vrot.lane.b32.xlu0 %v563, 2
    %v589 = vpop.permute.xlu0 %588
    %590 = vrot.lane.b32.xlu0 %v564, 2
    %v591 = vpop.permute.xlu0 %590
    %592 = vrot.lane.b32.xlu0 %v565, 2
    %v593 = vpop.permute.xlu0 %592
    %v598 = vsel %vm330, 0.0, %v587
    %v599 = vsel %vm330, 0.0, %v589
    %v600 = vsel %vm330, 0.0, %v591
    %v601 = vsel %vm330, 0.0, %v593
    %602 = vrot.lane.b32.xlu0 %v388, 116
    %v603 = vpop.permute.xlu0 %602
    %604 = vrot.lane.b32.xlu0 %v389, 116
    %v605 = vpop.permute.xlu0 %604
    %606 = vrot.lane.b32.xlu0 %v390, 116
    %v607 = vpop.permute.xlu0 %606
    %608 = vrot.lane.b32.xlu0 %v391, 116
    %v609 = vpop.permute.xlu0 %608
    %vm610 = vcmask 785408
    %v611 = vsel %vm610, %v603, 0
    %v613 = vsel %vm610, %v605, 0
    %v615 = vsel %vm610, %v607, 0
    %v617 = vsel %vm610, %v609, 0
    %619 = vmatprep.subr.mxu0 0.0
    %620 = vmatpush1.msra.mxu0 %v562
    %621 = vmatprep.subr.mxu0 0.0
    %622 = vmatpush1.msra.mxu0 %v563
    %623 = vmatprep.subr.mxu0 0.0
    %624 = vmatpush1.msra.mxu0 %v564
    %625 = vmatprep.subr.mxu0 0.0
    %626 = vmatpush1.msra.mxu0 %v565
    %627 = vmatprep.subr.mxu0 0.0
    %628 = vmatpush1.msra.mxu0 %v582
    %629 = vmatprep.subr.mxu0 0.0
    %630 = vmatpush1.msra.mxu0 %v583
    %631 = vmatprep.subr.mxu0 0.0
    %632 = vmatpush1.msra.mxu0 %v584
    %633 = vmatprep.subr.mxu0 0.0
    %634 = vmatpush1.msra.mxu0 %v585
    %635 = vmatprep.subr.mxu0 0.0
    %636 = vmatpush1.msra.mxu0 %v598
    %637 = vmatprep.subr.mxu0 0.0
    %638 = vmatpush1.msra.mxu0 %v599
    %639 = vmatprep.subr.mxu0 0.0
    %640 = vmatpush1.msra.mxu0 %v600
    %641 = vmatprep.subr.mxu0 0.0
    %642 = vmatpush1.msra.mxu0 %v601
    %643 = vmatprep.subr.mxu0 0.0
    %644 = vmatpush1.msra.mxu0 0.0
    %645 = vmatprep.subr.mxu0 0.0
    %646 = vmatpush1.msra.mxu0 0.0
    %647 = vmatprep.subr.mxu0 0.0
    %648 = vmatpush1.msra.mxu0 0.0
    %649 = vmatprep.subr.mxu0 0.0
    %650 = vmatpush1.msra.mxu0 0.0
    %651 = vmatprep.subr.mxu0 0.0
    %652 = vmatpush1.msra.mxu0 0.0
    %653 = vmatprep.subr.mxu0 0.0
    %654 = vmatpush1.msra.mxu0 0.0
    %655 = vmatprep.subr.mxu0 0.0
    %656 = vmatpush1.msra.mxu0 0.0
    %657 = vmatprep.subr.mxu0 0.0
    %658 = vmatpush1.msra.mxu0 0.0
    %659 = vmatprep.subr.mxu0 0.0
    %660 = vmatpush1.msra.mxu0 0.0
    %661 = vmatprep.subr.mxu0 0.0
    %662 = vmatpush1.msra.mxu0 0.0
    %663 = vmatprep.subr.mxu0 0.0
    %664 = vmatpush1.msra.mxu0 0.0
    %665 = vmatprep.subr.mxu0 0.0
    %666 = vmatpush1.msra.mxu0 0.0
    %667 = vmatprep.subr.mxu0 0.0
    %668 = vmatpush1.msra.mxu0 0.0
    %669 = vmatprep.subr.mxu0 0.0
    %670 = vmatpush1.msra.mxu0 0.0
    %671 = vmatprep.subr.mxu0 0.0
    %672 = vmatpush1.msra.mxu0 0.0
    %673 = vmatprep.subr.mxu0 0.0
    %674 = vmatpush1.msra.mxu0 0.0
    %675 = vmatprep.subr.mxu0 0.0
    %676 = vmatpush1.msra.mxu0 0.0
    %677 = vmatprep.subr.mxu0 0.0
    %678 = vmatpush1.msra.mxu0 0.0
    %679 = vmatprep.subr.mxu0 0.0
    %680 = vmatpush1.msra.mxu0 0.0
    %681 = vmatprep.subr.mxu0 0.0
    %682 = vmatpush1.msra.mxu0 0.0
    %683 = vmatprep.mubr.f32.mxu0 0.0
    %684 = vmatmul.mubr.f32.gmra.mrb[0].mxu0 %v611
    %v685 = vpop.f32.mrb[0].mxu0
    %v686 = vadd.f32 0.0, %v685
    %v687 = vpop.f32.mrb[0].mxu0
    %688 = vmatprep.mubr.f32.mxu0 0.0
    %689 = vmatmul.mubr.f32.gmra.mrb[0].mxu0 %v613
    %v690 = vpop.f32.mrb[0].mxu0
    %v691 = vadd.f32 0.0, %v690
    %v692 = vpop.f32.mrb[0].mxu0
    %693 = vmatprep.mubr.f32.mxu0 0.0
    %694 = vmatmul.mubr.f32.gmra.mrb[0].mxu0 %v615
    %v695 = vpop.f32.mrb[0].mxu0
    %v696 = vadd.f32 0.0, %v695
    %v697 = vpop.f32.mrb[0].mxu0
    %698 = vmatprep.mubr.f32.mxu0 0.0
    %699 = vmatmul.mubr.f32.gmra.mrb[0].mxu0 %v617
    %v700 = vpop.f32.mrb[0].mxu0
    %v701 = vadd.f32 0.0, %v700
    %v702 = vpop.f32.mrb[0].mxu0
    %703 = vdwg.mxu0
    %704 = vset.pattern.permute.xlu0 2
    %705 = vperm.xlu0 %704, %v493
    %v706 = vpop.permute.xlu0 %705
    %708 = vset.pattern.permute.xlu0 2
    %709 = vperm.xlu0 %708, %v494
    %v710 = vpop.permute.xlu0 %709
    %712 = vset.pattern.permute.xlu0 2
    %713 = vperm.xlu0 %712, %v495
    %v714 = vpop.permute.xlu0 %713
    %716 = vset.pattern.permute.xlu0 2
    %717 = vperm.xlu0 %716, %v496
    %v718 = vpop.permute.xlu0 %717
    %v720 = vmul.f32 %v686, %v706
    %v721 = vmul.f32 %v691, %v710
    %v722 = vmul.f32 %v696, %v714
    %v723 = vmul.f32 %v701, %v718
    %724 = vset.pattern.permute.xlu0 3
    %725 = vperm.xlu0 %724, %v493
    %v726 = vpop.permute.xlu0 %725
    %728 = vset.pattern.permute.xlu0 3
    %729 = vperm.xlu0 %728, %v494
    %v730 = vpop.permute.xlu0 %729
    %732 = vset.pattern.permute.xlu0 3
    %733 = vperm.xlu0 %732, %v495
    %v734 = vpop.permute.xlu0 %733
    %736 = vset.pattern.permute.xlu0 3
    %737 = vperm.xlu0 %736, %v496
    %v738 = vpop.permute.xlu0 %737
    %v740 = vadd.f32 %v720, %v726
    %v741 = vadd.f32 %v721, %v730
    %v742 = vadd.f32 %v722, %v734
    %v743 = vadd.f32 %v723, %v738
    %vm744 = vcmp.ge.f32.partialorder %v740, 0.0
    %vm745 = vcmp.ge.f32.partialorder %v741, 0.0
    %vm746 = vcmp.ge.f32.partialorder %v742, 0.0
    %vm747 = vcmp.ge.f32.partialorder %v743, 0.0
    %v748 = vmul.f32 %v740, 0.2
    %v749 = vmul.f32 %v741, 0.2
    %v750 = vmul.f32 %v742, 0.2
    %v751 = vmul.f32 %v743, 0.2
    %v752 = vsel %vm744, %v740, %v748
    %v753 = vsel %vm745, %v741, %v749
    %v754 = vsel %vm746, %v742, %v750
    %v755 = vsel %vm747, %v743, %v751
    %760 = vrot.lane.b32.xlu0 %v752, 127
    %v761 = vpop.permute.xlu0 %760
    %762 = vrot.lane.b32.xlu0 %v753, 127
    %v763 = vpop.permute.xlu0 %762
    %764 = vrot.lane.b32.xlu0 %v754, 127
    %v765 = vpop.permute.xlu0 %764
    %766 = vrot.lane.b32.xlu0 %v755, 127
    %v767 = vpop.permute.xlu0 %766
    %vm772 = vcmask 613376
    %v773 = vsel %vm772, %v761, 0.0
    %v774 = vsel %vm772, %v763, 0.0
    %v775 = vsel %vm772, %v765, 0.0
    %v776 = vsel %vm772, %v767, 0.0
    %777 = vrot.lane.b32.xlu0 %v752, 126
    %v778 = vpop.permute.xlu0 %777
    %779 = vrot.lane.b32.xlu0 %v753, 126
    %v780 = vpop.permute.xlu0 %779
    %781 = vrot.lane.b32.xlu0 %v754, 126
    %v782 = vpop.permute.xlu0 %781
    %783 = vrot.lane.b32.xlu0 %v755, 126
    %v784 = vpop.permute.xlu0 %783
    %v789 = vsel %vm500, %v778, 0.0
    %v790 = vsel %vm500, %v780, 0.0
    %v791 = vsel %vm500, %v782, 0.0
    %v792 = vsel %vm500, %v784, 0.0
    %v793 = vld [vmem:[#allocation6] sm:$0xff]
    %v794 = vld [vmem:[#allocation6 + $0x8] sm:$0xff]
    %v795 = vld [vmem:[#allocation6 + $0x10] sm:$0xff]
    %v796 = vld [vmem:[#allocation6 + $0x18] sm:$0xff]
    %v797 = vld [vmem:[#allocation6 + $0x20] sm:$0xff]
    %v798 = vld [vmem:[#allocation6 + $0x28] sm:$0xff]
    %v799 = vld [vmem:[#allocation6 + $0x30] sm:$0xff]
    %v800 = vld [vmem:[#allocation6 + $0x38] sm:$0xff]
    %801 = vset.pattern.permute.xlu0 4
    %802 = vperm.xlu0 %801, %v493
    %v803 = vpop.permute.xlu0 %802
    %805 = vset.pattern.permute.xlu0 4
    %806 = vperm.xlu0 %805, %v494
    %v807 = vpop.permute.xlu0 %806
    %809 = vset.pattern.permute.xlu0 4
    %810 = vperm.xlu0 %809, %v495
    %v811 = vpop.permute.xlu0 %810
    %813 = vset.pattern.permute.xlu0 4
    %814 = vperm.xlu0 %813, %v496
    %v815 = vpop.permute.xlu0 %814
    %825 = vrot.lane.b32.xlu0 %v793, 20
    %v826 = vpop.permute.xlu0 %825
    %827 = vrot.lane.b32.xlu0 %v794, 20
    %v828 = vpop.permute.xlu0 %827
    %829 = vrot.lane.b32.xlu0 %v795, 20
    %v830 = vpop.permute.xlu0 %829
    %831 = vrot.lane.b32.xlu0 %v796, 20
    %v832 = vpop.permute.xlu0 %831
    %833 = vrot.lane.b32.xlu0 %v797, 20
    %v834 = vpop.permute.xlu0 %833
    %835 = vrot.lane.b32.xlu0 %v798, 20
    %v836 = vpop.permute.xlu0 %835
    %837 = vrot.lane.b32.xlu0 %v799, 20
    %v838 = vpop.permute.xlu0 %837
    %839 = vrot.lane.b32.xlu0 %v800, 20
    %v840 = vpop.permute.xlu0 %839
    %vm841 = vcmask 162816
    %v842 = vsel %vm841, %v826, %v828
    %v843 = vsel %vm841, %v830, %v832
    %v844 = vsel %vm841, %v834, %v836
    %v845 = vsel %vm841, %v838, %v840
    %v846 = vsel %vm610, %v842, 0
    %v848 = vsel %vm610, %v843, 0
    %v850 = vsel %vm610, %v844, 0
    %v852 = vsel %vm610, %v845, 0
    %854 = vmatprep.subr.mxu0 0.0
    %855 = vmatpush1.msra.mxu0 %v752
    %856 = vmatprep.subr.mxu0 0.0
    %857 = vmatpush1.msra.mxu0 %v753
    %858 = vmatprep.subr.mxu0 0.0
    %859 = vmatpush1.msra.mxu0 %v754
    %860 = vmatprep.subr.mxu0 0.0
    %861 = vmatpush1.msra.mxu0 %v755
    %862 = vmatprep.subr.mxu0 0.0
    %863 = vmatpush1.msra.mxu0 %v773
    %864 = vmatprep.subr.mxu0 0.0
    %865 = vmatpush1.msra.mxu0 %v774
    %866 = vmatprep.subr.mxu0 0.0
    %867 = vmatpush1.msra.mxu0 %v775
    %868 = vmatprep.subr.mxu0 0.0
    %869 = vmatpush1.msra.mxu0 %v776
    %870 = vmatprep.subr.mxu0 0.0
    %871 = vmatpush1.msra.mxu0 %v789
    %872 = vmatprep.subr.mxu0 0.0
    %873 = vmatpush1.msra.mxu0 %v790
    %874 = vmatprep.subr.mxu0 0.0
    %875 = vmatpush1.msra.mxu0 %v791
    %876 = vmatprep.subr.mxu0 0.0
    %877 = vmatpush1.msra.mxu0 %v792
    %878 = vmatprep.subr.mxu0 0.0
    %879 = vmatpush1.msra.mxu0 0.0
    %880 = vmatprep.subr.mxu0 0.0
    %881 = vmatpush1.msra.mxu0 0.0
    %882 = vmatprep.subr.mxu0 0.0
    %883 = vmatpush1.msra.mxu0 0.0
    %884 = vmatprep.subr.mxu0 0.0
    %885 = vmatpush1.msra.mxu0 0.0
    %886 = vmatprep.subr.mxu0 0.0
    %887 = vmatpush1.msra.mxu0 0.0
    %888 = vmatprep.subr.mxu0 0.0
    %889 = vmatpush1.msra.mxu0 0.0
    %890 = vmatprep.subr.mxu0 0.0
    %891 = vmatpush1.msra.mxu0 0.0
    %892 = vmatprep.subr.mxu0 0.0
    %893 = vmatpush1.msra.mxu0 0.0
    %894 = vmatprep.subr.mxu0 0.0
    %895 = vmatpush1.msra.mxu0 0.0
    %896 = vmatprep.subr.mxu0 0.0
    %897 = vmatpush1.msra.mxu0 0.0
    %898 = vmatprep.subr.mxu0 0.0
    %899 = vmatpush1.msra.mxu0 0.0
    %900 = vmatprep.subr.mxu0 0.0
    %901 = vmatpush1.msra.mxu0 0.0
    %902 = vmatprep.subr.mxu0 0.0
    %903 = vmatpush1.msra.mxu0 0.0
    %904 = vmatprep.subr.mxu0 0.0
    %905 = vmatpush1.msra.mxu0 0.0
    %906 = vmatprep.subr.mxu0 0.0
    %907 = vmatpush1.msra.mxu0 0.0
    %908 = vmatprep.subr.mxu0 0.0
    %909 = vmatpush1.msra.mxu0 0.0
    %910 = vmatprep.subr.mxu0 0.0
    %911 = vmatpush1.msra.mxu0 0.0
    %912 = vmatprep.subr.mxu0 0.0
    %913 = vmatpush1.msra.mxu0 0.0
    %914 = vmatprep.subr.mxu0 0.0
    %915 = vmatpush1.msra.mxu0 0.0
    %916 = vmatprep.subr.mxu0 0.0
    %917 = vmatpush1.msra.mxu0 0.0
    %918 = vmatprep.mubr.f32.mxu0 0.0
    %919 = vmatmul.mubr.f32.gmra.mrb[0].mxu0 %v846
    %v920 = vpop.f32.mrb[0].mxu0
    %v921 = vadd.f32 %v803, %v920
    %v922 = vpop.f32.mrb[0].mxu0
    %923 = vmatprep.mubr.f32.mxu0 0.0
    %924 = vmatmul.mubr.f32.gmra.mrb[0].mxu0 %v848
    %v925 = vpop.f32.mrb[0].mxu0
    %v926 = vadd.f32 %v807, %v925
    %v927 = vpop.f32.mrb[0].mxu0
    %928 = vmatprep.mubr.f32.mxu0 0.0
    %929 = vmatmul.mubr.f32.gmra.mrb[0].mxu0 %v850
    %v930 = vpop.f32.mrb[0].mxu0
    %v931 = vadd.f32 %v811, %v930
    %v932 = vpop.f32.mrb[0].mxu0
    %933 = vmatprep.mubr.f32.mxu0 0.0
    %934 = vmatmul.mubr.f32.gmra.mrb[0].mxu0 %v852
    %v935 = vpop.f32.mrb[0].mxu0
    %v936 = vadd.f32 %v815, %v935
    %v937 = vpop.f32.mrb[0].mxu0
    %938 = vdwg.mxu0
    %943 = vrot.lane.b32.xlu0 %v921, 127
    %v944 = vpop.permute.xlu0 %943
    %945 = vrot.lane.b32.xlu0 %v926, 127
    %v946 = vpop.permute.xlu0 %945
    %947 = vrot.lane.b32.xlu0 %v931, 127
    %v948 = vpop.permute.xlu0 %947
    %949 = vrot.lane.b32.xlu0 %v936, 127
    %v950 = vpop.permute.xlu0 %949
    %v955 = vsel %vm772, %v944, 0.0
    %v956 = vsel %vm772, %v946, 0.0
    %v957 = vsel %vm772, %v948, 0.0
    %v958 = vsel %vm772, %v950, 0.0
    %959 = vrot.lane.b32.xlu0 %v921, 126
    %v960 = vpop.permute.xlu0 %959
    %961 = vrot.lane.b32.xlu0 %v926, 126
    %v962 = vpop.permute.xlu0 %961
    %963 = vrot.lane.b32.xlu0 %v931, 126
    %v964 = vpop.permute.xlu0 %963
    %965 = vrot.lane.b32.xlu0 %v936, 126
    %v966 = vpop.permute.xlu0 %965
    %v971 = vsel %vm500, %v960, 0.0
    %v972 = vsel %vm500, %v962, 0.0
    %v973 = vsel %vm500, %v964, 0.0
    %v974 = vsel %vm500, %v966, 0.0
    %v975 = vld [vmem:[%s5] sm:$0xff]
    %v976 = vld [vmem:[%s5 + $0x8] sm:$0xff]
    %v977 = vld [vmem:[%s6] sm:$0xff]
    %v978 = vld [vmem:[%s6 + $0x8] sm:$0xff]
    %980 = vset.pattern.permute.xlu0 5
    %981 = vperm.xlu0 %980, %v977
    %v982 = vpop.permute.xlu0 %981
    %985 = vset.pattern.permute.xlu0 5
    %986 = vperm.xlu0 %985, %v978
    %v987 = vpop.permute.xlu0 %986
    %v990 = vsel %vm610, %v975, 0
    %v993 = vsel %vm610, %v976, 0
    %995 = vmatprep.subr.mxu0 0.0
    %996 = vmatpush1.msra.mxu0 %v921
    %997 = vmatprep.subr.mxu0 0.0
    %998 = vmatpush1.msra.mxu0 %v926
    %999 = vmatprep.subr.mxu0 0.0
    %1000 = vmatpush1.msra.mxu0 %v931
    %1001 = vmatprep.subr.mxu0 0.0
    %1002 = vmatpush1.msra.mxu0 %v936
    %1003 = vmatprep.subr.mxu0 0.0
    %1004 = vmatpush1.msra.mxu0 %v955
    %1005 = vmatprep.subr.mxu0 0.0
    %1006 = vmatpush1.msra.mxu0 %v956
    %1007 = vmatprep.subr.mxu0 0.0
    %1008 = vmatpush1.msra.mxu0 %v957
    %1009 = vmatprep.subr.mxu0 0.0
    %1010 = vmatpush1.msra.mxu0 %v958
    %1011 = vmatprep.subr.mxu0 0.0
    %1012 = vmatpush1.msra.mxu0 %v971
    %1013 = vmatprep.subr.mxu0 0.0
    %1014 = vmatpush1.msra.mxu0 %v972
    %1015 = vmatprep.subr.mxu0 0.0
    %1016 = vmatpush1.msra.mxu0 %v973
    %1017 = vmatprep.subr.mxu0 0.0
    %1018 = vmatpush1.msra.mxu0 %v974
    %1019 = vmatprep.subr.mxu0 0.0
    %1020 = vmatpush1.msra.mxu0 0.0
    %1021 = vmatprep.subr.mxu0 0.0
    %1022 = vmatpush1.msra.mxu0 0.0
    %1023 = vmatprep.subr.mxu0 0.0
    %1024 = vmatpush1.msra.mxu0 0.0
    %1025 = vmatprep.subr.mxu0 0.0
    %1026 = vmatpush1.msra.mxu0 0.0
    %1027 = vmatprep.subr.mxu0 0.0
    %1028 = vmatpush1.msra.mxu0 0.0
    %1029 = vmatprep.subr.mxu0 0.0
    %1030 = vmatpush1.msra.mxu0 0.0
    %1031 = vmatprep.subr.mxu0 0.0
    %1032 = vmatpush1.msra.mxu0 0.0
    %1033 = vmatprep.subr.mxu0 0.0
    %1034 = vmatpush1.msra.mxu0 0.0
    %1035 = vmatprep.subr.mxu0 0.0
    %1036 = vmatpush1.msra.mxu0 0.0
    %1037 = vmatprep.subr.mxu0 0.0
    %1038 = vmatpush1.msra.mxu0 0.0
    %1039 = vmatprep.subr.mxu0 0.0
    %1040 = vmatpush1.msra.mxu0 0.0
    %1041 = vmatprep.subr.mxu0 0.0
    %1042 = vmatpush1.msra.mxu0 0.0
    %1043 = vmatprep.subr.mxu0 0.0
    %1044 = vmatpush1.msra.mxu0 0.0
    %1045 = vmatprep.subr.mxu0 0.0
    %1046 = vmatpush1.msra.mxu0 0.0
    %1047 = vmatprep.subr.mxu0 0.0
    %1048 = vmatpush1.msra.mxu0 0.0
    %1049 = vmatprep.subr.mxu0 0.0
    %1050 = vmatpush1.msra.mxu0 0.0
    %1051 = vmatprep.subr.mxu0 0.0
    %1052 = vmatpush1.msra.mxu0 0.0
    %1053 = vmatprep.subr.mxu0 0.0
    %1054 = vmatpush1.msra.mxu0 0.0
    %1055 = vmatprep.subr.mxu0 0.0
    %1056 = vmatpush1.msra.mxu0 0.0
    %1057 = vmatprep.subr.mxu0 0.0
    %1058 = vmatpush1.msra.mxu0 0.0
    %1059 = vmatprep.mubr.f32.mxu0 0.0
    %1060 = vmatmul.mubr.f32.gmra.mrb[0].mxu0 %v990
    %v1061 = vpop.f32.mrb[0].mxu0
    %v1062 = vadd.f32 %v982, %v1061
    %v1063 = vpop.f32.mrb[0].mxu0
    %1064 = vmatprep.mubr.f32.mxu0 0.0
    %1065 = vmatmul.mubr.f32.gmra.mrb[0].mxu0 %v993
    %v1066 = vpop.f32.mrb[0].mxu0
    %v1067 = vadd.f32 %v987, %v1066
    %v1068 = vpop.f32.mrb[0].mxu0
    %1069 = vdwg.mxu0
    %vm1070 = vcmask 621568
    %1071 = vst.msk [vmem:[%s7] sm:$0xff] %vm1070, %v1062
    %1072 = vst.msk [vmem:[%s7 + $0x8] sm:$0xff] %vm1070, %v1067
    // Predicated region
    $region42: #{pose_decoder_conv_forward.1} parent=1 // pred_check
      _
    $region43: #{pose_decoder_conv_forward.1} parent=1 // pred_check_branch
      %1074 = sbr.rel (0) target = $region45
    $region44: #{pose_decoder_conv_forward.1} parent=1 // pred_region
      _
    $region45: #{pose_decoder_conv_forward.1} parent=1 // pred_fallthru
      _
    // Predicated region
    $region46: #{pose_decoder_conv_forward.1} parent=1 // pred_check
      _
    $region47: #{pose_decoder_conv_forward.1} parent=1 // pred_check_branch
      %1076 = sbr.rel (0) target = $region49
    $region48: #{pose_decoder_conv_forward.1} parent=1 // pred_region
      _
    $region49: #{pose_decoder_conv_forward.1} parent=1 // pred_fallthru
      _
    %1077 = vsyncpa [#allocation3], 1
    %1078 = vsyncpa [#allocation5], 1

</llo_original>
